<compile_context>
chip_gen: v7x
topology: tpu7x:2x2x1
jax: 0.10.0
libtpu: 0.0.40
codegen_flags: <defaults>
</compile_context>

<pallas_src>
import functools
import math

import jax
import jax.numpy as jnp
from jax.experimental import pallas as pl
from jax.experimental.pallas import tpu as pltpu


def _round_up(x, m):
    return (x + m - 1) // m * m


def _time_embedding_kernel(t_ref, f_ref, w1_ref, b1_ref, w2_ref, b2_ref,
                           o_ref, emb_ref, acc_ref, *, half):
    """Grid axis 0 runs over chunks of the hidden dimension (2*dim, padded)."""
    k = pl.program_id(0)

    @pl.when(k == 0)
    def _init():
        # Sinusoidal embedding, computed once into VMEM scratch (no lane concat:
        # single iota + select keeps everything on VPU/EUP in one vreg pass).
        idx = jax.lax.broadcasted_iota(jnp.int32, emb_ref.shape, 1)     # (B_pad, dim)
        ang = t_ref[...] * f_ref[...]                                   # (B_pad,1)*(1,dim)
        emb = jnp.where(idx < half, jnp.sin(ang), jnp.cos(ang))
        emb_ref[...] = emb.astype(emb_ref.dtype)                        # bf16 MXU LHS
        acc_ref[...] = jnp.zeros_like(acc_ref)

    # Hidden-dim chunk: h = silu(emb @ W1[:, chunk] + b1[chunk]); acc += h @ W2[chunk, :]
    h = jnp.dot(emb_ref[...], w1_ref[...],
                preferred_element_type=jnp.float32) + b1_ref[...]       # f32
    h = h * jax.nn.sigmoid(h)                                           # SiLU in f32
    acc_ref[...] += jnp.dot(h.astype(w2_ref.dtype), w2_ref[...],
                            preferred_element_type=jnp.float32)

    @pl.when(k == pl.num_programs(0) - 1)
    def _finalize():
        o_ref[...] = (acc_ref[...] + b2_ref[...]).astype(o_ref.dtype)


def time_embedding(time, w1, b1, w2, b2, *, hidden_tile=512):
    """time: (B,) float32 -> (B, dim) float32. Matches the PyTorch TimeEmbedding forward."""
    B = time.shape[0]
    dim, H = w1.shape                         # H = 2*dim
    assert w2.shape == (H, dim)
    half = dim // 2
    if half < 2:
        # PyTorch module divides by (half - 1); dim < 4 is undefined there too.
        raise ValueError("TimeEmbedding requires dim >= 4")

    # Padded geometry: lane-dense stores + fully-packed bf16 sublanes.
    B_pad = _round_up(B, 16)                  # bf16 LHS sublane packing
    H_pad = _round_up(H, 128)                 # hidden axis (lane-dense matmul-1 output)
    N_pad = _round_up(dim, 128)               # output axis (lane-dense final store)

    # Hidden tile: multiple of 128 that divides H_pad, capped at hidden_tile.
    m = H_pad // 128
    tn = 128 * math.gcd(m, max(hidden_tile // 128, 1))
    n_steps = H_pad // tn

    # ---- host-side prep (layout plumbing only) ----------------------------------
    scale = math.log(10000.0) / (half - 1)
    freqs_half = jnp.exp(jnp.arange(half, dtype=jnp.float32) * (-scale))
    freqs = jnp.concatenate([freqs_half, freqs_half]).reshape(1, dim)   # exp(-s*(k%half))

    t_col = jnp.zeros((B_pad, 1), jnp.float32).at[:B, 0].set(time.astype(jnp.float32))

    w1_p = jnp.zeros((dim, H_pad), jnp.bfloat16).at[:, :H].set(w1.astype(jnp.bfloat16))
    b1_p = jnp.zeros((1, H_pad), jnp.float32).at[0, :H].set(b1.astype(jnp.float32))
    w2_p = jnp.zeros((H_pad, N_pad), jnp.bfloat16).at[:H, :dim].set(w2.astype(jnp.bfloat16))
    b2_p = jnp.zeros((1, N_pad), jnp.float32).at[0, :dim].set(b2.astype(jnp.float32))

    kernel = functools.partial(_time_embedding_kernel, half=half)

    out_pad = pl.pallas_call(
        kernel,
        out_shape=jax.ShapeDtypeStruct((B_pad, N_pad), jnp.float32),
        grid_spec=pltpu.PrefetchScalarGridSpec(
            num_scalar_prefetch=0,
            grid=(n_steps,),
            in_specs=[
                pl.BlockSpec((B_pad, 1), lambda k: (0, 0)),     # timestep column
                pl.BlockSpec((1, dim), lambda k: (0, 0)),       # frequency row
                pl.BlockSpec((dim, tn), lambda k: (0, k)),      # W1 hidden chunk (bf16)
                pl.BlockSpec((1, tn), lambda k: (0, k)),        # b1 hidden chunk (f32)
                pl.BlockSpec((tn, N_pad), lambda k: (k, 0)),    # W2 hidden chunk (bf16)
                pl.BlockSpec((1, N_pad), lambda k: (0, 0)),     # b2 (f32)
            ],
            out_specs=pl.BlockSpec((B_pad, N_pad), lambda k: (0, 0)),
            scratch_shapes=[
                pltpu.VMEM((B_pad, dim), jnp.bfloat16),         # sinusoidal embedding
                pltpu.VMEM((B_pad, N_pad), jnp.float32),        # f32 output accumulator
            ],
        ),
        compiler_params=pltpu.CompilerParams(
            dimension_semantics=("arbitrary",),                 # reduction over hidden chunks
        ),
    )(t_col, freqs, w1_p, b1_p, w2_p, b2_p)

    return out_pad[:B, :dim]


def init_params(key, dim):
    """Deterministic synthetic parameters for the 2-layer MLP (stored (in, out))."""
    k1, k2, k3, k4 = jax.random.split(key, 4)
    w1 = jax.random.normal(k1, (dim, dim * 2), jnp.float32) * (1.0 / math.sqrt(dim))
    b1 = jax.random.normal(k2, (dim * 2,), jnp.float32) * 0.01
    w2 = jax.random.normal(k3, (dim * 2, dim), jnp.float32) * (1.0 / math.sqrt(dim * 2))
    b2 = jax.random.normal(k4, (dim,), jnp.float32) * 0.01
    return w1, b1, w2, b2


def time_embedding_ref(time, w1, b1, w2, b2):
    """Pure-JAX f32 reference mirroring the PyTorch forward exactly."""
    dim = w2.shape[1]
    half = dim // 2
    scale = math.log(10000.0) / (half - 1)
    freqs = jnp.exp(jnp.arange(half, dtype=jnp.float32) * (-scale))
    ang = time[:, None] * freqs[None, :]
    emb = jnp.concatenate([jnp.sin(ang), jnp.cos(ang)], axis=-1)
    h = emb @ w1 + b1
    h = h * jax.nn.sigmoid(h)
    return h @ w2 + b2


if __name__ == "__main__":
    key = jax.random.PRNGKey(0)
    dim = 32
    B = 8

    kt, kp = jax.random.split(key)
    # diffusion timesteps (integer-like, cast to float)
    time = jax.random.randint(kt, (B,), 0, 1000).astype(jnp.float32)
    w1, b1, w2, b2 = init_params(kp, dim)

    out = time_embedding(time, w1, b1, w2, b2)
    out = jax.block_until_ready(out)

    ref = time_embedding_ref(time, w1, b1, w2, b2)
    assert out.shape == (B, dim), out.shape
    # bf16 matmul operands with f32 accumulation -> looser tolerance than pure f32.
    err = float(jnp.abs(out - ref).max())
    assert jnp.allclose(out, ref, atol=5e-2, rtol=5e-2), err

    print("KERNEL_OK")
</pallas_src>

<mosaic_0001>
module attributes {stable_mosaic.version = 11 : i64} {
  func.func @_time_embedding_kernel(%arg0: i32, %arg1: memref<16x1xf32, #tpu.memory_space<vmem>>, %arg2: memref<1x32xf32, #tpu.memory_space<vmem>>, %arg3: memref<32x128xbf16, #tpu.memory_space<vmem>>, %arg4: memref<1x128xf32, #tpu.memory_space<vmem>>, %arg5: memref<128x128xbf16, #tpu.memory_space<vmem>>, %arg6: memref<1x128xf32, #tpu.memory_space<vmem>>, %arg7: memref<16x128xf32, #tpu.memory_space<vmem>>, %arg8: memref<16x32xbf16, #tpu.memory_space<vmem>>, %arg9: memref<16x128xf32, #tpu.memory_space<vmem>>) attributes {dimension_semantics = [#tpu.dimension_semantics<arbitrary>], iteration_bounds = array<i64: 1>, scalar_prefetch = 0 : i64, scratch_operands = 2 : i64, tpu.core_type = #tpu.core_type<tc>, window_params = [{pipeline_mode = #tpu.pipeline_mode<synchronous>, transform_indices = @transform_0, window_bounds = array<i64: 16, 1>}, {pipeline_mode = #tpu.pipeline_mode<synchronous>, transform_indices = @transform_1, window_bounds = array<i64: 1, 32>}, {transform_indices = @transform_2, window_bounds = array<i64: 32, 128>}, {transform_indices = @transform_3, window_bounds = array<i64: 1, 128>}, {transform_indices = @transform_4, window_bounds = array<i64: 128, 128>}, {pipeline_mode = #tpu.pipeline_mode<synchronous>, transform_indices = @transform_5, window_bounds = array<i64: 1, 128>}, {pipeline_mode = #tpu.pipeline_mode<synchronous>, transform_indices = @transform_6, window_bounds = array<i64: 16, 128>}]} {
    %c0_i32 = arith.constant 0 : i32
    %0 = arith.cmpi eq, %arg0, %c0_i32 : i32
    %1 = arith.extui %0 : i1 to i32
    %c0_i32_0 = arith.constant 0 : i32
    %2 = arith.cmpi ne, %1, %c0_i32_0 : i32
    scf.if %2 {
      %24 = tpu.iota {dimensions = array<i32: 1>} : vector<16x32xi32>
      %c0_16 = arith.constant 0 : index
      %c0_17 = arith.constant 0 : index
      %25 = vector.load %arg1[%c0_16, %c0_17] : memref<16x1xf32, #tpu.memory_space<vmem>>, vector<16x1xf32>
      %c0_18 = arith.constant 0 : index
      %c0_19 = arith.constant 0 : index
      %26 = vector.load %arg2[%c0_18, %c0_19] : memref<1x32xf32, #tpu.memory_space<vmem>>, vector<1x32xf32>
      %27 = vector.broadcast %25 : vector<16x1xf32> to vector<16x32xf32>
      %28 = vector.broadcast %26 : vector<1x32xf32> to vector<16x32xf32>
      %29 = arith.mulf %27, %28 : vector<16x32xf32>
      %c16_i32 = arith.constant 16 : i32
      %30 = vector.broadcast %c16_i32 : i32 to vector<16x32xi32>
      %31 = arith.cmpi slt, %24, %30 : vector<16x32xi32>
      %32 = math.sin %29 : vector<16x32xf32>
      %33 = math.cos %29 : vector<16x32xf32>
      %34 = arith.select %31, %32, %33 : vector<16x32xi1>, vector<16x32xf32>
      %35 = arith.truncf %34 : vector<16x32xf32> to vector<16x32xbf16>
      %c0_20 = arith.constant 0 : index
      %c0_21 = arith.constant 0 : index
      %36 = vector.load %arg8[%c0_20, %c0_21] : memref<16x32xbf16, #tpu.memory_space<vmem>>, vector<16x32xbf16>
      tpu.vector_store %arg8[%c0_20, %c0_21], %35 {strides = array<i32>} : memref<16x32xbf16, #tpu.memory_space<vmem>>, vector<16x32xbf16>,
      %cst_22 = arith.constant 0.000000e+00 : f32
      %37 = vector.broadcast %cst_22 : f32 to vector<16x128xf32>
      %c0_23 = arith.constant 0 : index
      %c0_24 = arith.constant 0 : index
      %38 = vector.load %arg9[%c0_23, %c0_24] : memref<16x128xf32, #tpu.memory_space<vmem>>, vector<16x128xf32>
      tpu.vector_store %arg9[%c0_23, %c0_24], %37 {strides = array<i32>} : memref<16x128xf32, #tpu.memory_space<vmem>>, vector<16x128xf32>,
    } else {
    }
    %c0 = arith.constant 0 : index
    %c0_1 = arith.constant 0 : index
    %3 = vector.load %arg8[%c0, %c0_1] : memref<16x32xbf16, #tpu.memory_space<vmem>>, vector<16x32xbf16>
    %c0_2 = arith.constant 0 : index
    %c0_3 = arith.constant 0 : index
    %4 = vector.load %arg3[%c0_2, %c0_3] : memref<32x128xbf16, #tpu.memory_space<vmem>>, vector<32x128xbf16>
    %cst = arith.constant dense<0.000000e+00> : vector<16x128xf32>
    %5 = tpu.matmul %3, %4, %cst {dimension_numbers = #tpu.dot_dimension_numbers<[1], [0], [0], [1], [0, 0, 1, 1], [], []>} : vector<16x32xbf16>, vector<32x128xbf16>, vector<16x128xf32> -> vector<16x128xf32>
    %c0_4 = arith.constant 0 : index
    %c0_5 = arith.constant 0 : index
    %6 = vector.load %arg4[%c0_4, %c0_5] : memref<1x128xf32, #tpu.memory_space<vmem>>, vector<1x128xf32>
    %7 = vector.broadcast %6 : vector<1x128xf32> to vector<16x128xf32>
    %8 = arith.addf %5, %7 : vector<16x128xf32>
    %9 = arith.negf %8 : vector<16x128xf32>
    %10 = math.exp %9 : vector<16x128xf32>
    %cst_6 = arith.constant 1.000000e+00 : f32
    %11 = vector.broadcast %cst_6 : f32 to vector<16x128xf32>
    %12 = arith.addf %11, %10 : vector<16x128xf32>
    %13 = arith.divf %11, %12 : vector<16x128xf32>
    %14 = arith.mulf %8, %13 : vector<16x128xf32>
    %c0_7 = arith.constant 0 : index
    %c0_8 = arith.constant 0 : index
    %15 = vector.load %arg9[%c0_7, %c0_8] : memref<16x128xf32, #tpu.memory_space<vmem>>, vector<16x128xf32>
    %16 = arith.truncf %14 : vector<16x128xf32> to vector<16x128xbf16>
    %c0_9 = arith.constant 0 : index
    %c0_10 = arith.constant 0 : index
    %17 = vector.load %arg5[%c0_9, %c0_10] : memref<128x128xbf16, #tpu.memory_space<vmem>>, vector<128x128xbf16>
    %cst_11 = arith.constant dense<0.000000e+00> : vector<16x128xf32>
    %18 = tpu.matmul %16, %17, %cst_11 {dimension_numbers = #tpu.dot_dimension_numbers<[1], [0], [0], [1], [0, 0, 1, 1], [], []>} : vector<16x128xbf16>, vector<128x128xbf16>, vector<16x128xf32> -> vector<16x128xf32>
    %19 = arith.addf %15, %18 : vector<16x128xf32>
    %c0_12 = arith.constant 0 : index
    %c0_13 = arith.constant 0 : index
    %20 = vector.load %arg9[%c0_12, %c0_13] : memref<16x128xf32, #tpu.memory_space<vmem>>, vector<16x128xf32>
    tpu.vector_store %arg9[%c0_12, %c0_13], %19 {strides = array<i32>} : memref<16x128xf32, #tpu.memory_space<vmem>>, vector<16x128xf32>,
    %c0_i32_14 = arith.constant 0 : i32
    %21 = arith.cmpi eq, %arg0, %c0_i32_14 : i32
    %22 = arith.extui %21 : i1 to i32
    %c0_i32_15 = arith.constant 0 : i32
    %23 = arith.cmpi ne, %22, %c0_i32_15 : i32
    scf.if %23 {
      %c0_16 = arith.constant 0 : index
      %c0_17 = arith.constant 0 : index
      %24 = vector.load %arg9[%c0_16, %c0_17] : memref<16x128xf32, #tpu.memory_space<vmem>>, vector<16x128xf32>
      %c0_18 = arith.constant 0 : index
      %c0_19 = arith.constant 0 : index
      %25 = vector.load %arg6[%c0_18, %c0_19] : memref<1x128xf32, #tpu.memory_space<vmem>>, vector<1x128xf32>
      %26 = vector.broadcast %25 : vector<1x128xf32> to vector<16x128xf32>
      %27 = arith.addf %24, %26 : vector<16x128xf32>
      %c0_20 = arith.constant 0 : index
      %c0_21 = arith.constant 0 : index
      %28 = vector.load %arg7[%c0_20, %c0_21] : memref<16x128xf32, #tpu.memory_space<vmem>>, vector<16x128xf32>
      tpu.vector_store %arg7[%c0_20, %c0_21], %27 {strides = array<i32>} : memref<16x128xf32, #tpu.memory_space<vmem>>, vector<16x128xf32>,
    } else {
    }
    return
  }
  func.func @transform_0(%arg0: i32) -> (i32, i32) {
    %c0_i32 = arith.constant 0 : i32
    %c0_i32_0 = arith.constant 0 : i32
    %c0_i32_1 = arith.constant 0 : i32
    return %c0_i32, %c0_i32_0 : i32, i32
  }
  func.func @transform_1(%arg0: i32) -> (i32, i32) {
    %c0_i32 = arith.constant 0 : i32
    %c0_i32_0 = arith.constant 0 : i32
    %c0_i32_1 = arith.constant 0 : i32
    return %c0_i32, %c0_i32_0 : i32, i32
  }
  func.func @transform_2(%arg0: i32) -> (i32, i32) {
    %c0_i32 = arith.constant 0 : i32
    %c0_i32_0 = arith.constant 0 : i32
    return %c0_i32, %arg0 : i32, i32
  }
  func.func @transform_3(%arg0: i32) -> (i32, i32) {
    %c0_i32 = arith.constant 0 : i32
    %c0_i32_0 = arith.constant 0 : i32
    return %c0_i32, %arg0 : i32, i32
  }
  func.func @transform_4(%arg0: i32) -> (i32, i32) {
    %c0_i32 = arith.constant 0 : i32
    %c0_i32_0 = arith.constant 0 : i32
    return %arg0, %c0_i32 : i32, i32
  }
  func.func @transform_5(%arg0: i32) -> (i32, i32) {
    %c0_i32 = arith.constant 0 : i32
    %c0_i32_0 = arith.constant 0 : i32
    %c0_i32_1 = arith.constant 0 : i32
    return %c0_i32, %c0_i32_0 : i32, i32
  }
  func.func @transform_6(%arg0: i32) -> (i32, i32) {
    %c0_i32 = arith.constant 0 : i32
    %c0_i32_0 = arith.constant 0 : i32
    %c0_i32_1 = arith.constant 0 : i32
    return %c0_i32, %c0_i32_0 : i32, i32
  }
}

</mosaic_0001>

<llo_original>
// kernel: tpu_custom_call.1
$region0: #{tpu_custom_call.1}
  #allocation0 [shape = 'u32[]', space=smem, size = 0x4, offset = 0x4, fixed_abs, tag = 'smem constant byte address 0x4 - core index']
  #allocation1 [shape = 'u32[144,128]{1,0:T(1,128)}', space=vmem, size = 0x12000, scoped, tag = 'internal scratch']
  #allocation2 [shape = 'bf16[16,32]{1,0:T(16,128)(2,1)}', space=vmem, size = 0x1000, scoped, tag = 'scratch operand']
  #allocation3 [shape = 'f32[16,128]{1,0:T(8,128)}', space=vmem, size = 0x2000, scoped, tag = 'scratch operand']
  %s0 = inlined_call_operand.vmem [shape: f32[16,1], index: 0, kind: input, shape index: {}]
  %s1 = inlined_call_operand.vmem [shape: f32[1,32], index: 1, kind: input, shape index: {}]
  %s2 = inlined_call_operand.vmem [shape: bf16[32,128], index: 2, kind: input, shape index: {}]
  %s3 = inlined_call_operand.vmem [shape: f32[1,128], index: 3, kind: input, shape index: {}]
  %s4 = inlined_call_operand.hbm [shape: bf16[128,128], index: 4, kind: input, shape index: {}]
  %s5 = inlined_call_operand.vmem [shape: f32[1,128], index: 5, kind: input, shape index: {}]
  %s6 = inlined_call_operand.hbm [shape: f32[16,128], index: 6, kind: output, shape index: {}]
  %s7 = sld [smem:[#allocation0]]
  $region46: #{tpu_custom_call.1} parent=0
    _
  %s9 = ssub.s32 1, %s7
  %s10 = scalar_select 0, %s9, %s7
  $region1: #{tpu_custom_call.1} parent=0
    #allocation4 [shape = 'u8[32768]{0}', space=vmem, size = 0x8000, scoped, tag = 'input window, operand 4, single buffered']
    #allocation5 [shape = 's32[1]{0}', space=sflag, size = 0x4, scoped, tag = 'scoped memory for tpu_custom_call.1']
    #allocation6 [shape = 's32[1]{0}', space=sflag, size = 0x4, scoped, tag = 'scoped memory for tpu_custom_call.1']
    #allocation7 [shape = 'u8[8192]{0}', space=vmem, size = 0x2000, scoped, tag = 'output window, operand 0, single buffered']
    %11 = vsyncpa [#allocation5], 0
    %12 = vsyncpa [#allocation6], 0
    // Predicated region
    $region2: #{tpu_custom_call.1} parent=1 // pred_check
      _
    $region3: #{tpu_custom_call.1} parent=1 // pred_check_branch
      %14 = sbr.rel (0) target = $region5
    $region4: #{tpu_custom_call.1} parent=1 // pred_region
      _
    $region5: #{tpu_custom_call.1} parent=1 // pred_fallthru
      _
    // Predicated region
    $region6: #{tpu_custom_call.1} parent=1 // pred_check
      _
    $region7: #{tpu_custom_call.1} parent=1 // pred_check_branch
      %16 = sbr.rel (0) target = $region9
    $region8: #{tpu_custom_call.1} parent=1 // pred_region
      _
    $region9: #{tpu_custom_call.1} parent=1 // pred_fallthru
      _
    // Predicated region
    $region10: #{tpu_custom_call.1} parent=1 // pred_check
      _
    $region11: #{tpu_custom_call.1} parent=1 // pred_check_branch
      %18 = sbr.rel (0) target = $region13
    $region12: #{tpu_custom_call.1} parent=1 // pred_region
      _
    $region13: #{tpu_custom_call.1} parent=1 // pred_fallthru
      _
    // Predicated region
    $region14: #{tpu_custom_call.1} parent=1 // pred_check
      _
    $region15: #{tpu_custom_call.1} parent=1 // pred_check_branch
      %20 = sbr.rel (0) target = $region17
    $region16: #{tpu_custom_call.1} parent=1 // pred_region
      _
    $region17: #{tpu_custom_call.1} parent=1 // pred_fallthru
      _
    // Predicated region
    $region18: #{tpu_custom_call.1} parent=1 // pred_check
      _
    $region19: #{tpu_custom_call.1} parent=1 // pred_check_branch
      %22 = sbr.rel (0) target = $region21
    $region20: #{tpu_custom_call.1} parent=1 // pred_region
      %s24 = ssub.s32 1024, 1024
      %25 = vsyncadd [#allocation5], %s24
      %s26 = sshll.u32 [#allocation4], 4
      %s27 = int_to_ptr.vmem [resolvable:$true] %s26
      %32 = dma.hbm_to_vmem [thread:$0]  %s4, 1024, %s27, [#allocation5], 64, 64, 4
    $region21: #{tpu_custom_call.1} parent=1 // pred_fallthru
      _
    // Predicated region
    $region22: #{tpu_custom_call.1} parent=1 // pred_check
      _
    $region23: #{tpu_custom_call.1} parent=1 // pred_check_branch
      %34 = sbr.rel (0) target = $region25
    $region24: #{tpu_custom_call.1} parent=1 // pred_region
      _
    $region25: #{tpu_custom_call.1} parent=1 // pred_fallthru
      _
    // Predicated region
    $region26: #{tpu_custom_call.1} parent=1 // pred_check
      _
    $region27: #{tpu_custom_call.1} parent=1 // pred_check_branch
      %36 = sbr.rel (0) target = $region29
    $region28: #{tpu_custom_call.1} parent=1 // pred_region
      %37 = dma.done [#allocation5], 1024
    $region29: #{tpu_custom_call.1} parent=1 // pred_fallthru
      _
    %p39 = scmp.eq.s32.totalorder 0, 0
    // Predicated region
    $region30: #{tpu_custom_call.1} parent=1 // pred_check
      %p40 = pneg %p39
    $region31: #{tpu_custom_call.1} parent=1 // pred_check_branch
      %42 = sbr.rel (%p40) target = $region33
    $region32: #{tpu_custom_call.1} parent=1 // pred_region
      %v43 = vlaneseq
      %v44 = vand.u32 %v43, 127
      %v45 = vld [vmem:[%s0] sm:$0xff]
      %v46 = vld [vmem:[%s0 + $0x8] sm:$0xff]
      %v47 = vld [vmem:[%s1] sm:$0x1]
      %49 = vset.pattern.permute.xlu0 0
      %50 = vperm.xlu0 %49, %v45
      %v51 = vpop.permute.xlu0 %50
      %54 = vset.pattern.permute.xlu0 0
      %55 = vperm.xlu0 %54, %v46
      %v56 = vpop.permute.xlu0 %55
      %v59 = vlaneseq
      %v60 = vshrl.u32 %v59, 7
      %v61 = vsub.s32 0, %v60
      %v62 = vrot.slane %v47, %v61
      %v64 = vmul.f32 %v51, %v62
      %v65 = vmul.f32 %v56, %v62
      %vm66 = vcmp.lt.s32.totalorder %v44, 16
      %v67 = vand.u32 2147483647, %v64
      %vm68 = vcmp.le.f32.partialorder %v67, 0.7853982
      %vm69 = vcmp.lt.s32.totalorder %v64, 0
      %v70 = vand.u32 %v64, 2139095040
      %v71 = vshrl.u32 %v70, 23
      %v72 = vsub.s32 %v71, 127
      %v73 = vand.u32 2147483647, %v64
      %v74 = vand.u32 %v73, 8388607
      %v75 = vor.u32 %v74, 8388608
      %v76 = vsub.s32 0, %v75
      %v77 = vadd.s32 %v72, 1
      %vm78 = vcmp.gt.s32.totalorder %v77, 0
      %v79 = vsel %vm78, %v77, 0
      %v80 = vshrl.u32 %v79, 5
      %v81 = vand.u32 %v79, 31
      %v82 = vsub.s32 32, %v81
      %v83 = vshrl.u32 683565275, %v82
      %v84 = vshll.u32 683565275, %v81
      %v85 = vshrl.u32 2475754826, %v82
      %v86 = vor.u32 %v84, %v85
      %v87 = vshll.u32 2475754826, %v81
      %v88 = vshrl.u32 2131351028, %v82
      %v89 = vor.u32 %v87, %v88
      %v90 = vshll.u32 2131351028, %v81
      %v91 = vshrl.u32 2102212464, %v82
      %v92 = vor.u32 %v90, %v91
      %v93 = vshll.u32 2102212464, %v81
      %v94 = vshrl.u32 920167782, %v82
      %v95 = vor.u32 %v93, %v94
      %v96 = vshll.u32 920167782, %v81
      %v97 = vshrl.u32 1326507024, %v82
      %v98 = vor.u32 %v96, %v97
      %vm99 = vcmp.lt.s32.totalorder %v80, 1
      %vm100 = vcmp.lt.s32.totalorder %v80, 2
      %vm101 = vcmp.lt.s32.totalorder %v80, 3
      %vm102 = vcmp.lt.s32.totalorder %v80, 4
      %v103 = vsel %vm99, %v83, %v86
      %v104 = vsel %vm102, %v92, 2102212464
      %v105 = vsel %vm101, %v89, %v104
      %v106 = vsel %vm100, %v103, %v105
      %v107 = vsel %vm99, %v86, %v89
      %v108 = vsel %vm102, %v95, 920167782
      %v109 = vsel %vm101, %v92, %v108
      %v110 = vsel %vm100, %v107, %v109
      %v111 = vsel %vm99, %v89, %v92
      %v112 = vsel %vm102, %v98, 1326507024
      %v113 = vsel %vm101, %v95, %v112
      %v114 = vsel %vm100, %v111, %v113
      %v115 = vshll.u32 %v75, 8
      %v116 = vmul.u32.u64.compose %v115, %v114
      %v117 = vextract.low.u32 %v116
      %v118 = vextract.high.u32 %v116
      %v119 = vmul.u32.u64.compose %v115, %v110
      %v120 = vextract.low.u32 %v119
      %v121 = vextract.high.u32 %v119
      %v122 = vmul.u32 %v115, %v106
      %v123 = vadd.s32 %v118, %v120
      %vm124 = vc.u32 %v118, %v120
      %v125 = vadd.s32 %v121, 1
      %v126 = vsel %vm124, %v125, %v121
      %v127 = vadd.s32 %v122, %v126
      %v128 = vadd.s32 %v127, 536870912
      %v129 = vshrl.u32 %v128, 30
      %v130 = vshll.u32 %v129, 30
      %v131 = vsub.s32 %v127, %v130
      %vm132 = vcmp.lt.s32.totalorder %v131, 0
      %v133 = vsub.s32 0, %v131
      %v134 = vsel %vm132, %v133, %v131
      %v135 = vclz %v134
      %v136 = vsub.s32 %v135, 2
      %vm137 = vcmp.gt.s32.totalorder 0, %v136
      %v138 = vsel %vm137, 0, %v136
      %v139 = vsub.s32 32, %v138
      %v140 = vshll.u32 %v131, %v138
      %v141 = vshrl.u32 %v123, %v139
      %v142 = vor.u32 %v140, %v141
      %v143 = vsub.s32 4294967266, %v138
      %v144 = vadd.s32 %v143, 127
      %v145 = vshll.u32 %v144, 23
      %v146 = vor.u32 4788187, %v145
      %v147 = vand.u32 2147483647, %v146
      %v149 = vcvt.s32.f32 %v142
      %v150 = vmul.f32 %v149, %v147
      %v151 = vxor.u32 %v150, 2147483648
      %v152 = vsel %vm69, %v151, %v150
      %v153 = vsub.s32 4, %v129
      %v154 = vsel %vm69, %v153, %v129
      %v155 = vsel %vm68, %v64, %v152
      %v156 = vsel %vm68, 0, %v154
      %v157 = vcosq.f32.pop %v155
      %v158 = vsinq.f32.pop %v155
      %vm159 = vweird.f32 %v64
      %v160 = vadd.s32 %v156, 3
      %v161 = vand.u32 %v160, 3
      %vm162 = vcmp.lt.s32.totalorder %v161, 2
      %vm163 = vcmp.eq.s32.totalorder %v161, 0
      %v164 = vxor.u32 %v158, 2147483648
      %v165 = vsel %vm163, %v157, %v164
      %vm166 = vcmp.eq.s32.totalorder %v161, 2
      %v167 = vxor.u32 %v157, 2147483648
      %v168 = vsel %vm166, %v167, %v158
      %v169 = vsel %vm162, %v165, %v168
      %v170 = vsel %vm159, nan, %v169
      %v171 = vand.u32 2147483647, %v65
      %vm172 = vcmp.le.f32.partialorder %v171, 0.7853982
      %vm173 = vcmp.lt.s32.totalorder %v65, 0
      %v174 = vand.u32 %v65, 2139095040
      %v175 = vshrl.u32 %v174, 23
      %v176 = vsub.s32 %v175, 127
      %v177 = vand.u32 2147483647, %v65
      %v178 = vand.u32 %v177, 8388607
      %v179 = vor.u32 %v178, 8388608
      %v180 = vsub.s32 0, %v179
      %v181 = vadd.s32 %v176, 1
      %vm182 = vcmp.gt.s32.totalorder %v181, 0
      %v183 = vsel %vm182, %v181, 0
      %v184 = vshrl.u32 %v183, 5
      %v185 = vand.u32 %v183, 31
      %v186 = vsub.s32 32, %v185
      %v187 = vshrl.u32 683565275, %v186
      %v188 = vshll.u32 683565275, %v185
      %v189 = vshrl.u32 2475754826, %v186
      %v190 = vor.u32 %v188, %v189
      %v191 = vshll.u32 2475754826, %v185
      %v192 = vshrl.u32 2131351028, %v186
      %v193 = vor.u32 %v191, %v192
      %v194 = vshll.u32 2131351028, %v185
      %v195 = vshrl.u32 2102212464, %v186
      %v196 = vor.u32 %v194, %v195
      %v197 = vshll.u32 2102212464, %v185
      %v198 = vshrl.u32 920167782, %v186
      %v199 = vor.u32 %v197, %v198
      %v200 = vshll.u32 920167782, %v185
      %v201 = vshrl.u32 1326507024, %v186
      %v202 = vor.u32 %v200, %v201
      %vm203 = vcmp.lt.s32.totalorder %v184, 1
      %vm204 = vcmp.lt.s32.totalorder %v184, 2
      %vm205 = vcmp.lt.s32.totalorder %v184, 3
      %vm206 = vcmp.lt.s32.totalorder %v184, 4
      %v207 = vsel %vm203, %v187, %v190
      %v208 = vsel %vm206, %v196, 2102212464
      %v209 = vsel %vm205, %v193, %v208
      %v210 = vsel %vm204, %v207, %v209
      %v211 = vsel %vm203, %v190, %v193
      %v212 = vsel %vm206, %v199, 920167782
      %v213 = vsel %vm205, %v196, %v212
      %v214 = vsel %vm204, %v211, %v213
      %v215 = vsel %vm203, %v193, %v196
      %v216 = vsel %vm206, %v202, 1326507024
      %v217 = vsel %vm205, %v199, %v216
      %v218 = vsel %vm204, %v215, %v217
      %v219 = vshll.u32 %v179, 8
      %v220 = vmul.u32.u64.compose %v219, %v218
      %v221 = vextract.low.u32 %v220
      %v222 = vextract.high.u32 %v220
      %v223 = vmul.u32.u64.compose %v219, %v214
      %v224 = vextract.low.u32 %v223
      %v225 = vextract.high.u32 %v223
      %v226 = vmul.u32 %v219, %v210
      %v227 = vadd.s32 %v222, %v224
      %vm228 = vc.u32 %v222, %v224
      %v229 = vadd.s32 %v225, 1
      %v230 = vsel %vm228, %v229, %v225
      %v231 = vadd.s32 %v226, %v230
      %v232 = vadd.s32 %v231, 536870912
      %v233 = vshrl.u32 %v232, 30
      %v234 = vshll.u32 %v233, 30
      %v235 = vsub.s32 %v231, %v234
      %vm236 = vcmp.lt.s32.totalorder %v235, 0
      %v237 = vsub.s32 0, %v235
      %v238 = vsel %vm236, %v237, %v235
      %v239 = vclz %v238
      %v240 = vsub.s32 %v239, 2
      %vm241 = vcmp.gt.s32.totalorder 0, %v240
      %v242 = vsel %vm241, 0, %v240
      %v243 = vsub.s32 32, %v242
      %v244 = vshll.u32 %v235, %v242
      %v245 = vshrl.u32 %v227, %v243
      %v246 = vor.u32 %v244, %v245
      %v247 = vsub.s32 4294967266, %v242
      %v248 = vadd.s32 %v247, 127
      %v249 = vshll.u32 %v248, 23
      %v250 = vor.u32 4788187, %v249
      %v251 = vand.u32 2147483647, %v250
      %v253 = vcvt.s32.f32 %v246
      %v254 = vmul.f32 %v253, %v251
      %v255 = vxor.u32 %v254, 2147483648
      %v256 = vsel %vm173, %v255, %v254
      %v257 = vsub.s32 4, %v233
      %v258 = vsel %vm173, %v257, %v233
      %v259 = vsel %vm172, %v65, %v256
      %v260 = vsel %vm172, 0, %v258
      %v261 = vcosq.f32.pop %v259
      %v262 = vsinq.f32.pop %v259
      %vm263 = vweird.f32 %v65
      %v264 = vadd.s32 %v260, 3
      %v265 = vand.u32 %v264, 3
      %vm266 = vcmp.lt.s32.totalorder %v265, 2
      %vm267 = vcmp.eq.s32.totalorder %v265, 0
      %v268 = vxor.u32 %v262, 2147483648
      %v269 = vsel %vm267, %v261, %v268
      %vm270 = vcmp.eq.s32.totalorder %v265, 2
      %v271 = vxor.u32 %v261, 2147483648
      %v272 = vsel %vm270, %v271, %v262
      %v273 = vsel %vm266, %v269, %v272
      %v274 = vsel %vm263, nan, %v273
      %v275 = vand.u32 2147483647, %v64
      %vm276 = vcmp.le.f32.partialorder %v275, 0.7853982
      %vm277 = vcmp.lt.s32.totalorder %v64, 0
      %v278 = vand.u32 %v64, 2139095040
      %v279 = vshrl.u32 %v278, 23
      %v280 = vsub.s32 %v279, 127
      %v281 = vand.u32 2147483647, %v64
      %v282 = vand.u32 %v281, 8388607
      %v283 = vor.u32 %v282, 8388608
      %v284 = vsub.s32 0, %v283
      %v285 = vadd.s32 %v280, 1
      %vm286 = vcmp.gt.s32.totalorder %v285, 0
      %v287 = vsel %vm286, %v285, 0
      %v288 = vshrl.u32 %v287, 5
      %v289 = vand.u32 %v287, 31
      %v290 = vsub.s32 32, %v289
      %v291 = vshrl.u32 683565275, %v290
      %v292 = vshll.u32 683565275, %v289
      %v293 = vshrl.u32 2475754826, %v290
      %v294 = vor.u32 %v292, %v293
      %v295 = vshll.u32 2475754826, %v289
      %v296 = vshrl.u32 2131351028, %v290
      %v297 = vor.u32 %v295, %v296
      %v298 = vshll.u32 2131351028, %v289
      %v299 = vshrl.u32 2102212464, %v290
      %v300 = vor.u32 %v298, %v299
      %v301 = vshll.u32 2102212464, %v289
      %v302 = vshrl.u32 920167782, %v290
      %v303 = vor.u32 %v301, %v302
      %v304 = vshll.u32 920167782, %v289
      %v305 = vshrl.u32 1326507024, %v290
      %v306 = vor.u32 %v304, %v305
      %vm307 = vcmp.lt.s32.totalorder %v288, 1
      %vm308 = vcmp.lt.s32.totalorder %v288, 2
      %vm309 = vcmp.lt.s32.totalorder %v288, 3
      %vm310 = vcmp.lt.s32.totalorder %v288, 4
      %v311 = vsel %vm307, %v291, %v294
      %v312 = vsel %vm310, %v300, 2102212464
      %v313 = vsel %vm309, %v297, %v312
      %v314 = vsel %vm308, %v311, %v313
      %v315 = vsel %vm307, %v294, %v297
      %v316 = vsel %vm310, %v303, 920167782
      %v317 = vsel %vm309, %v300, %v316
      %v318 = vsel %vm308, %v315, %v317
      %v319 = vsel %vm307, %v297, %v300
      %v320 = vsel %vm310, %v306, 1326507024
      %v321 = vsel %vm309, %v303, %v320
      %v322 = vsel %vm308, %v319, %v321
      %v323 = vshll.u32 %v283, 8
      %v324 = vmul.u32.u64.compose %v323, %v322
      %v325 = vextract.low.u32 %v324
      %v326 = vextract.high.u32 %v324
      %v327 = vmul.u32.u64.compose %v323, %v318
      %v328 = vextract.low.u32 %v327
      %v329 = vextract.high.u32 %v327
      %v330 = vmul.u32 %v323, %v314
      %v331 = vadd.s32 %v326, %v328
      %vm332 = vc.u32 %v326, %v328
      %v333 = vadd.s32 %v329, 1
      %v334 = vsel %vm332, %v333, %v329
      %v335 = vadd.s32 %v330, %v334
      %v336 = vadd.s32 %v335, 536870912
      %v337 = vshrl.u32 %v336, 30
      %v338 = vshll.u32 %v337, 30
      %v339 = vsub.s32 %v335, %v338
      %vm340 = vcmp.lt.s32.totalorder %v339, 0
      %v341 = vsub.s32 0, %v339
      %v342 = vsel %vm340, %v341, %v339
      %v343 = vclz %v342
      %v344 = vsub.s32 %v343, 2
      %vm345 = vcmp.gt.s32.totalorder 0, %v344
      %v346 = vsel %vm345, 0, %v344
      %v347 = vsub.s32 32, %v346
      %v348 = vshll.u32 %v339, %v346
      %v349 = vshrl.u32 %v331, %v347
      %v350 = vor.u32 %v348, %v349
      %v351 = vsub.s32 4294967266, %v346
      %v352 = vadd.s32 %v351, 127
      %v353 = vshll.u32 %v352, 23
      %v354 = vor.u32 4788187, %v353
      %v355 = vand.u32 2147483647, %v354
      %v357 = vcvt.s32.f32 %v350
      %v358 = vmul.f32 %v357, %v355
      %v359 = vxor.u32 %v358, 2147483648
      %v360 = vsel %vm277, %v359, %v358
      %v361 = vsub.s32 4, %v337
      %v362 = vsel %vm277, %v361, %v337
      %v363 = vsel %vm276, %v64, %v360
      %v364 = vsel %vm276, 0, %v362
      %v365 = vcosq.f32.pop %v363
      %v366 = vsinq.f32.pop %v363
      %vm367 = vweird.f32 %v64
      %v368 = vand.u32 %v364, 3
      %vm369 = vcmp.lt.s32.totalorder %v368, 2
      %vm370 = vcmp.eq.s32.totalorder %v368, 0
      %v371 = vxor.u32 %v366, 2147483648
      %v372 = vsel %vm370, %v365, %v371
      %vm373 = vcmp.eq.s32.totalorder %v368, 2
      %v374 = vxor.u32 %v365, 2147483648
      %v375 = vsel %vm373, %v374, %v366
      %v376 = vsel %vm369, %v372, %v375
      %v377 = vsel %vm367, nan, %v376
      %v378 = vand.u32 2147483647, %v65
      %vm379 = vcmp.le.f32.partialorder %v378, 0.7853982
      %vm380 = vcmp.lt.s32.totalorder %v65, 0
      %v381 = vand.u32 %v65, 2139095040
      %v382 = vshrl.u32 %v381, 23
      %v383 = vsub.s32 %v382, 127
      %v384 = vand.u32 2147483647, %v65
      %v385 = vand.u32 %v384, 8388607
      %v386 = vor.u32 %v385, 8388608
      %v387 = vsub.s32 0, %v386
      %v388 = vadd.s32 %v383, 1
      %vm389 = vcmp.gt.s32.totalorder %v388, 0
      %v390 = vsel %vm389, %v388, 0
      %v391 = vshrl.u32 %v390, 5
      %v392 = vand.u32 %v390, 31
      %v393 = vsub.s32 32, %v392
      %v394 = vshrl.u32 683565275, %v393
      %v395 = vshll.u32 683565275, %v392
      %v396 = vshrl.u32 2475754826, %v393
      %v397 = vor.u32 %v395, %v396
      %v398 = vshll.u32 2475754826, %v392
      %v399 = vshrl.u32 2131351028, %v393
      %v400 = vor.u32 %v398, %v399
      %v401 = vshll.u32 2131351028, %v392
      %v402 = vshrl.u32 2102212464, %v393
      %v403 = vor.u32 %v401, %v402
      %v404 = vshll.u32 2102212464, %v392
      %v405 = vshrl.u32 920167782, %v393
      %v406 = vor.u32 %v404, %v405
      %v407 = vshll.u32 920167782, %v392
      %v408 = vshrl.u32 1326507024, %v393
      %v409 = vor.u32 %v407, %v408
      %vm410 = vcmp.lt.s32.totalorder %v391, 1
      %vm411 = vcmp.lt.s32.totalorder %v391, 2
      %vm412 = vcmp.lt.s32.totalorder %v391, 3
      %vm413 = vcmp.lt.s32.totalorder %v391, 4
      %v414 = vsel %vm410, %v394, %v397
      %v415 = vsel %vm413, %v403, 2102212464
      %v416 = vsel %vm412, %v400, %v415
      %v417 = vsel %vm411, %v414, %v416
      %v418 = vsel %vm410, %v397, %v400
      %v419 = vsel %vm413, %v406, 920167782
      %v420 = vsel %vm412, %v403, %v419
      %v421 = vsel %vm411, %v418, %v420
      %v422 = vsel %vm410, %v400, %v403
      %v423 = vsel %vm413, %v409, 1326507024
      %v424 = vsel %vm412, %v406, %v423
      %v425 = vsel %vm411, %v422, %v424
      %v426 = vshll.u32 %v386, 8
      %v427 = vmul.u32.u64.compose %v426, %v425
      %v428 = vextract.low.u32 %v427
      %v429 = vextract.high.u32 %v427
      %v430 = vmul.u32.u64.compose %v426, %v421
      %v431 = vextract.low.u32 %v430
      %v432 = vextract.high.u32 %v430
      %v433 = vmul.u32 %v426, %v417
      %v434 = vadd.s32 %v429, %v431
      %vm435 = vc.u32 %v429, %v431
      %v436 = vadd.s32 %v432, 1
      %v437 = vsel %vm435, %v436, %v432
      %v438 = vadd.s32 %v433, %v437
      %v439 = vadd.s32 %v438, 536870912
      %v440 = vshrl.u32 %v439, 30
      %v441 = vshll.u32 %v440, 30
      %v442 = vsub.s32 %v438, %v441
      %vm443 = vcmp.lt.s32.totalorder %v442, 0
      %v444 = vsub.s32 0, %v442
      %v445 = vsel %vm443, %v444, %v442
      %v446 = vclz %v445
      %v447 = vsub.s32 %v446, 2
      %vm448 = vcmp.gt.s32.totalorder 0, %v447
      %v449 = vsel %vm448, 0, %v447
      %v450 = vsub.s32 32, %v449
      %v451 = vshll.u32 %v442, %v449
      %v452 = vshrl.u32 %v434, %v450
      %v453 = vor.u32 %v451, %v452
      %v454 = vsub.s32 4294967266, %v449
      %v455 = vadd.s32 %v454, 127
      %v456 = vshll.u32 %v455, 23
      %v457 = vor.u32 4788187, %v456
      %v458 = vand.u32 2147483647, %v457
      %v460 = vcvt.s32.f32 %v453
      %v461 = vmul.f32 %v460, %v458
      %v462 = vxor.u32 %v461, 2147483648
      %v463 = vsel %vm380, %v462, %v461
      %v464 = vsub.s32 4, %v440
      %v465 = vsel %vm380, %v464, %v440
      %v466 = vsel %vm379, %v65, %v463
      %v467 = vsel %vm379, 0, %v465
      %v468 = vcosq.f32.pop %v466
      %v469 = vsinq.f32.pop %v466
      %vm470 = vweird.f32 %v65
      %v471 = vand.u32 %v467, 3
      %vm472 = vcmp.lt.s32.totalorder %v471, 2
      %vm473 = vcmp.eq.s32.totalorder %v471, 0
      %v474 = vxor.u32 %v469, 2147483648
      %v475 = vsel %vm473, %v468, %v474
      %vm476 = vcmp.eq.s32.totalorder %v471, 2
      %v477 = vxor.u32 %v468, 2147483648
      %v478 = vsel %vm476, %v477, %v469
      %v479 = vsel %vm472, %v475, %v478
      %v480 = vsel %vm470, nan, %v479
      %v481 = vsel %vm66, %v170, %v377
      %v482 = vsel %vm66, %v274, %v480
      %v483 = vpack.c.bf16 %v482, %v481
      %vm484 = vcmask 261120
      %485 = vst.msk [vmem:[#allocation2] sm:$0xff] %vm484, %v483
      %486 = vst [vmem:[#allocation3] sm:$0xff] 0.0
      %487 = vst [vmem:[#allocation3 + $0x8] sm:$0xff] 0.0
    $region33: #{tpu_custom_call.1} parent=1 // pred_fallthru
      _
    %v488 = vld [vmem:[#allocation2] sm:$0xff]
    %v489 = vld [vmem:[%s2] sm:$0xf]
    %v490 = vld [vmem:[%s2 + $0x4] sm:$0xf]
    %v491 = vld [vmem:[%s2 + $0x8] sm:$0xf]
    %v492 = vld [vmem:[%s2 + $0xc] sm:$0xf]
    %v493 = vld [vmem:[%s3] sm:$0x1]
    %v495 = vlaneseq
    %v496 = vshrl.u32 %v495, 7
    %v497 = vsub.s32 0, %v496
    %v498 = vrot.slane %v493, %v497
    %v504 = vunpack.c.l.b16 %v489
    %v505 = vunpack.c.l.b16 %v490
    %v506 = vunpack.c.l.b16 %v491
    %v507 = vunpack.c.l.b16 %v492
    %v508 = vpack.c.b16 %v505, %v504
    %v509 = vpack.c.b16 %v507, %v506
    %vm512 = vcmask 261120
    %v514 = vsel %vm512, %v488, 0
    %516 = vmatprep.subr.bf16.mxu0 0
    %517 = vmatpush1.bf16.msra.mxu0 %v508
    %518 = vmatprep.subr.bf16.mxu0 0
    %519 = vmatpush1.bf16.msra.mxu0 %v509
    %520 = vmatprep.subr.bf16.mxu0 0
    %521 = vmatpush1.bf16.msra.mxu0 0
    %522 = vmatprep.subr.bf16.mxu0 0
    %523 = vmatpush1.bf16.msra.mxu0 0
    %524 = vmatprep.subr.bf16.mxu0 0
    %525 = vmatpush1.bf16.msra.mxu0 0
    %526 = vmatprep.subr.bf16.mxu0 0
    %527 = vmatpush1.bf16.msra.mxu0 0
    %528 = vmatprep.subr.bf16.mxu0 0
    %529 = vmatpush1.bf16.msra.mxu0 0
    %530 = vmatprep.subr.bf16.mxu0 0
    %531 = vmatpush1.bf16.msra.mxu0 0
    %532 = vmatprep.subr.bf16.mxu0 0
    %533 = vmatpush1.bf16.msra.mxu0 0
    %534 = vmatprep.subr.bf16.mxu0 0
    %535 = vmatpush1.bf16.msra.mxu0 0
    %536 = vmatprep.subr.bf16.mxu0 0
    %537 = vmatpush1.bf16.msra.mxu0 0
    %538 = vmatprep.subr.bf16.mxu0 0
    %539 = vmatpush1.bf16.msra.mxu0 0
    %540 = vmatprep.subr.bf16.mxu0 0
    %541 = vmatpush1.bf16.msra.mxu0 0
    %542 = vmatprep.subr.bf16.mxu0 0
    %543 = vmatpush1.bf16.msra.mxu0 0
    %544 = vmatprep.subr.bf16.mxu0 0
    %545 = vmatpush1.bf16.msra.mxu0 0
    %546 = vmatprep.subr.bf16.mxu0 0
    %547 = vmatpush1.bf16.msra.mxu0 0
    %548 = vmatprep.mubr.bf16.mxu0 0
    %549 = vmatmul.mubr.bf16.gmra.mrb[0].mxu0 %v514
    %v550 = vpop.f32.mrb[0].mxu0
    %v551 = vadd.f32 %v498, %v550
    %v552 = vpop.f32.mrb[0].mxu0
    %v553 = vpop.f32.mrb[0].mxu0
    %v554 = vadd.f32 %v498, %v553
    %v555 = vpop.f32.mrb[0].mxu0
    %556 = vdwg.mxu0
    %v557 = vxor.u32 %v551, 2147483648
    %v558 = vxor.u32 %v554, 2147483648
    %v559 = vmul.f32 %v557, 1.442695
    %v560 = vpow.pop %v559
    %v561 = vmul.f32 %v558, 1.442695
    %v562 = vpow.pop %v561
    %v563 = vadd.f32 %v560, 1.0
    %v564 = vadd.f32 %v562, 1.0
    %v565 = vrcp.pop %v563
    %v566 = vmul.f32 1.0, %v565
    %v567 = vrcp.pop %v564
    %v568 = vmul.f32 1.0, %v567
    %v569 = vmul.f32 %v551, %v566
    %v570 = vmul.f32 %v554, %v568
    %v571 = vld [vmem:[#allocation3] sm:$0xff]
    %v572 = vld [vmem:[#allocation3 + $0x8] sm:$0xff]
    %v573 = vpack.c.bf16 %v570, %v569
    %v574 = vld [vmem:[#allocation4] sm:$0xf]
    %v575 = vld [vmem:[#allocation4 + $0x4] sm:$0xf]
    %v576 = vld [vmem:[#allocation4 + $0x8] sm:$0xf]
    %v577 = vld [vmem:[#allocation4 + $0xc] sm:$0xf]
    %v578 = vld [vmem:[#allocation4 + $0x10] sm:$0xf]
    %v579 = vld [vmem:[#allocation4 + $0x14] sm:$0xf]
    %v580 = vld [vmem:[#allocation4 + $0x18] sm:$0xf]
    %v581 = vld [vmem:[#allocation4 + $0x1c] sm:$0xf]
    %v582 = vld [vmem:[#allocation4 + $0x20] sm:$0xf]
    %v583 = vld [vmem:[#allocation4 + $0x24] sm:$0xf]
    %v584 = vld [vmem:[#allocation4 + $0x28] sm:$0xf]
    %v585 = vld [vmem:[#allocation4 + $0x2c] sm:$0xf]
    %v586 = vld [vmem:[#allocation4 + $0x30] sm:$0xf]
    %v587 = vld [vmem:[#allocation4 + $0x34] sm:$0xf]
    %v588 = vld [vmem:[#allocation4 + $0x38] sm:$0xf]
    %v589 = vld [vmem:[#allocation4 + $0x3c] sm:$0xf]
    %v606 = vunpack.c.l.b16 %v574
    %v607 = vunpack.c.l.b16 %v575
    %v608 = vunpack.c.l.b16 %v576
    %v609 = vunpack.c.l.b16 %v577
    %v610 = vunpack.c.l.b16 %v578
    %v611 = vunpack.c.l.b16 %v579
    %v612 = vunpack.c.l.b16 %v580
    %v613 = vunpack.c.l.b16 %v581
    %v614 = vunpack.c.l.b16 %v582
    %v615 = vunpack.c.l.b16 %v583
    %v616 = vunpack.c.l.b16 %v584
    %v617 = vunpack.c.l.b16 %v585
    %v618 = vunpack.c.l.b16 %v586
    %v619 = vunpack.c.l.b16 %v587
    %v620 = vunpack.c.l.b16 %v588
    %v621 = vunpack.c.l.b16 %v589
    %v622 = vpack.c.b16 %v607, %v606
    %v623 = vpack.c.b16 %v609, %v608
    %v624 = vpack.c.b16 %v611, %v610
    %v625 = vpack.c.b16 %v613, %v612
    %v626 = vpack.c.b16 %v615, %v614
    %v627 = vpack.c.b16 %v617, %v616
    %v628 = vpack.c.b16 %v619, %v618
    %v629 = vpack.c.b16 %v621, %v620
    %638 = vmatprep.subr.bf16.mxu0 0
    %639 = vmatpush1.bf16.msra.mxu0 %v622
    %640 = vmatprep.subr.bf16.mxu0 0
    %641 = vmatpush1.bf16.msra.mxu0 %v623
    %642 = vmatprep.subr.bf16.mxu0 0
    %643 = vmatpush1.bf16.msra.mxu0 %v624
    %644 = vmatprep.subr.bf16.mxu0 0
    %645 = vmatpush1.bf16.msra.mxu0 %v625
    %646 = vmatprep.subr.bf16.mxu0 0
    %647 = vmatpush1.bf16.msra.mxu0 %v626
    %648 = vmatprep.subr.bf16.mxu0 0
    %649 = vmatpush1.bf16.msra.mxu0 %v627
    %650 = vmatprep.subr.bf16.mxu0 0
    %651 = vmatpush1.bf16.msra.mxu0 %v628
    %652 = vmatprep.subr.bf16.mxu0 0
    %653 = vmatpush1.bf16.msra.mxu0 %v629
    %654 = vmatprep.subr.bf16.mxu0 0
    %655 = vmatpush1.bf16.msra.mxu0 0
    %656 = vmatprep.subr.bf16.mxu0 0
    %657 = vmatpush1.bf16.msra.mxu0 0
    %658 = vmatprep.subr.bf16.mxu0 0
    %659 = vmatpush1.bf16.msra.mxu0 0
    %660 = vmatprep.subr.bf16.mxu0 0
    %661 = vmatpush1.bf16.msra.mxu0 0
    %662 = vmatprep.subr.bf16.mxu0 0
    %663 = vmatpush1.bf16.msra.mxu0 0
    %664 = vmatprep.subr.bf16.mxu0 0
    %665 = vmatpush1.bf16.msra.mxu0 0
    %666 = vmatprep.subr.bf16.mxu0 0
    %667 = vmatpush1.bf16.msra.mxu0 0
    %668 = vmatprep.subr.bf16.mxu0 0
    %669 = vmatpush1.bf16.msra.mxu0 0
    %670 = vmatprep.mubr.bf16.mxu0 0
    %671 = vmatmul.mubr.bf16.gmra.mrb[0].mxu0 %v573
    %v672 = vpop.f32.mrb[0].mxu0
    %v673 = vadd.f32 0.0, %v672
    %v674 = vpop.f32.mrb[0].mxu0
    %v675 = vpop.f32.mrb[0].mxu0
    %v676 = vadd.f32 0.0, %v675
    %v677 = vpop.f32.mrb[0].mxu0
    %678 = vdwg.mxu0
    %v679 = vadd.f32 %v571, %v673
    %v680 = vadd.f32 %v572, %v676
    %681 = vst [vmem:[#allocation3] sm:$0xff] %v679
    %682 = vst [vmem:[#allocation3 + $0x8] sm:$0xff] %v680
    // Predicated region
    $region34: #{tpu_custom_call.1} parent=1 // pred_check
      %p683 = pneg %p39
    $region35: #{tpu_custom_call.1} parent=1 // pred_check_branch
      %685 = sbr.rel (%p683) target = $region37
    $region36: #{tpu_custom_call.1} parent=1 // pred_region
      %v686 = vld [vmem:[#allocation3] sm:$0xff]
      %v687 = vld [vmem:[#allocation3 + $0x8] sm:$0xff]
      %v688 = vld [vmem:[%s5] sm:$0x1]
      %v690 = vlaneseq
      %v691 = vshrl.u32 %v690, 7
      %v692 = vsub.s32 0, %v691
      %v693 = vrot.slane %v688, %v692
      %v695 = vadd.f32 %v686, %v693
      %v696 = vadd.f32 %v687, %v693
      %697 = vst [vmem:[#allocation7] sm:$0xff] %v695
      %698 = vst [vmem:[#allocation7 + $0x8] sm:$0xff] %v696
    $region37: #{tpu_custom_call.1} parent=1 // pred_fallthru
      _
    // Predicated region
    $region38: #{tpu_custom_call.1} parent=1 // pred_check
      _
    $region39: #{tpu_custom_call.1} parent=1 // pred_check_branch
      %700 = sbr.rel (0) target = $region41
    $region40: #{tpu_custom_call.1} parent=1 // pred_region
      %s702 = ssub.s32 256, 256
      %703 = vsyncadd [#allocation6], %s702
      %s704 = sshll.u32 [#allocation7], 4
      %s705 = int_to_ptr.vmem [resolvable:$true] %s704
      %710 = dma.vmem_to_hbm [thread:$0]  %s705, 256, %s6, [#allocation6], 128, 128, 8
    $region41: #{tpu_custom_call.1} parent=1 // pred_fallthru
      _
    // Predicated region
    $region42: #{tpu_custom_call.1} parent=1 // pred_check
      _
    $region43: #{tpu_custom_call.1} parent=1 // pred_check_branch
      %712 = sbr.rel (0) target = $region45
    $region44: #{tpu_custom_call.1} parent=1 // pred_region
      %713 = dma.done [#allocation6], 256
    $region45: #{tpu_custom_call.1} parent=1 // pred_fallthru
      _
    %714 = vsyncpa [#allocation5], 1
    %715 = vsyncpa [#allocation6], 1

</llo_original>
